<compile_context>
chip_gen: v7x
topology: tpu7x:2x2x1
jax: 0.10.0
libtpu: 0.0.40
codegen_flags: <defaults>
</compile_context>

<pallas_src>
import jax
import jax.numpy as jnp
from jax.experimental import pallas as pl
from jax.experimental.pallas import tpu as pltpu


def e2e_kernel(bias_ref, w1_ref, w2_ref, a_ref, out_ref):
    # bias_ref: (TO, 1)    combined b1 + b2 for this output-channel tile (f32)
    # w1_ref  : (C, TO, N) conv1xd weights, per-c (o, k), compute dtype
    # w2_ref  : (C, TO, N) convdx1 weights, per-c (o, k), compute dtype
    # a_ref   : (C, N, N)  A[b] in its native dtype, axes (c, i, j)
    # out_ref : (TO, N, N)
    a = a_ref[...].astype(w1_ref.dtype)   # one in-VMEM cast (no-op if dtypes match)

    # "1xd" conv: col[o, j] = sum_{c,k} W1[o,c,k] * A[c,k,j]
    # One batched MXU contraction over c (f32 accumulation), then a small
    # VPU reduce over the channel batch dim.
    colC = jnp.einsum('cok,ckj->coj', w1_ref[...], a,
                      preferred_element_type=jnp.float32)      # (C, TO, N)
    col = colC.sum(axis=0) + bias_ref[...]                     # (TO, N) + (TO, 1)

    # "dx1" conv: row[o, i] = sum_{c,k} W2[o,c,k] * A[c,i,k]
    rowC = jnp.einsum('cok,cik->coi', w2_ref[...], a,
                      preferred_element_type=jnp.float32)      # (C, TO, N)
    row = rowC.sum(axis=0)                                     # (TO, N)

    # out[o,i,j] = row[o,i] + col[o,j]  (the concat-broadcast add), done in f32,
    # cast only at the lane-dense store (no-op when out dtype is f32).
    out_ref[...] = (row[:, :, None] + col[:, None, :]).astype(out_ref.dtype)


def _pad_up(n, m):
    return -(-n // m) * m


def _choose_o_tile(O, N, out_itemsize):
    """Largest output-channel tile whose double-buffered out block stays modest."""
    lanes = _pad_up(N, 128)
    subs = _pad_up(N, 8)
    budget = 24 << 20                       # ~24 MiB for the 2x out buffers
    to = O
    while to > 8 and 2 * to * subs * lanes * out_itemsize > budget:
        to = _pad_up(-(-to // 2), 8)        # halve, round up to a multiple of 8
    return min(to, O)


def e2e_forward(A, W1, b1, W2, b2, node, *,
                compute_dtype=jnp.float32, out_dtype=jnp.float32):
    """BrainNetCNN E2E forward.

    A : (..., C, node, node)  mirrors A.view(-1, C, node, node); kept in its
                              native dtype (cast to compute_dtype inside the kernel).
    W1: (O, C, node)  == conv1xd.weight squeezed (kernel (d, 1))
    W2: (O, C, node)  == convdx1.weight squeezed (kernel (1, d))
    b1, b2: (O,) biases.
    Returns (B, O, node, node) in out_dtype (float32 by default, matching PyTorch).
    """
    O, C, N = W1.shape
    assert N == node, "E2E requires d == node for the concat+add to be valid"
    A4 = A.reshape(-1, C, N, N)             # free view; NO dtype cast in the wrapper
    B = A4.shape[0]

    # Weights are tiny; lay them out per-c as (C, O, N) once on the host.
    w1 = jnp.transpose(W1, (1, 0, 2)).astype(compute_dtype)    # (C, O, N)
    w2 = jnp.transpose(W2, (1, 0, 2)).astype(compute_dtype)    # (C, O, N)
    bias = (b1.astype(jnp.float32) + b2.astype(jnp.float32)).reshape(O, 1)

    out_itemsize = jnp.dtype(out_dtype).itemsize
    TO = _choose_o_tile(O, N, out_itemsize)
    o_tiles = pl.cdiv(O, TO)

    # VMEM budget: 2x (out block + A block + weight blocks) + intermediates + slack.
    lanes, subs = _pad_up(N, 128), _pad_up(N, 8)
    a_bytes = C * subs * lanes * jnp.dtype(A4.dtype).itemsize
    w_bytes = 2 * C * _pad_up(TO, 8) * lanes * jnp.dtype(compute_dtype).itemsize
    out_bytes = TO * subs * lanes * out_itemsize
    interm = 2 * C * _pad_up(TO, 8) * lanes * 4 + TO * subs * lanes * 4
    vmem_limit = int(min(100 << 20,
                         max(16 << 20,
                             2 * (a_bytes + w_bytes + out_bytes) + interm + (4 << 20))))

    # Two (C*N)-deep contractions per output element + the broadcast add; bytes are
    # dominated by the (B, O, N, N) writeback.
    flops = 4 * B * O * C * N * N + B * O * N * N
    bytes_accessed = (A4.size * jnp.dtype(A4.dtype).itemsize
                      + (w1.size + w2.size) * jnp.dtype(compute_dtype).itemsize
                      + bias.size * 4
                      + B * O * N * N * out_itemsize)

    out = pl.pallas_call(
        e2e_kernel,
        out_shape=jax.ShapeDtypeStruct((B, O, N, N), out_dtype),
        grid=(B, o_tiles),                   # o innermost: A[b] stays VMEM-resident
        in_specs=[
            pl.BlockSpec((TO, 1), lambda b, ot: (ot, 0)),               # bias tile
            pl.BlockSpec((C, TO, N), lambda b, ot: (0, ot, 0)),         # W1 tile
            pl.BlockSpec((C, TO, N), lambda b, ot: (0, ot, 0)),         # W2 tile
            pl.BlockSpec((None, C, N, N), lambda b, ot: (b, 0, 0, 0)),  # A[b]
        ],
        out_specs=pl.BlockSpec((None, TO, N, N), lambda b, ot: (b, ot, 0, 0)),
        compiler_params=pltpu.CompilerParams(
            dimension_semantics=("parallel", "parallel"),
            vmem_limit_bytes=vmem_limit),
        cost_estimate=pl.CostEstimate(flops=flops, transcendentals=0,
                                      bytes_accessed=bytes_accessed),
    )(bias, w1, w2, A4)
    return out


def e2e_reference(A, W1, b1, W2, b2, node):
    """Pure-JAX reference mirroring the PyTorch forward exactly (f32)."""
    O, C, N = W1.shape
    A4 = A.reshape(-1, C, N, N).astype(jnp.float32)
    W1f = W1.astype(jnp.float32)
    W2f = W2.astype(jnp.float32)
    col = jnp.einsum('ock,bckj->boj', W1f, A4) + b1[None, :, None]  # conv1xd output row
    row = jnp.einsum('ock,bcik->boi', W2f, A4) + b2[None, :, None]  # convdx1 output col
    return row[:, :, :, None] + col[:, :, None, :]


if __name__ == "__main__":
    # Small shapes consistent with the module: node == d (required by forward).
    # The original hard-codes node=200; we use NODE=16 to keep the demo small.
    # (Tune / benchmark at node=200 -- the toy shape is a different regime.)
    B, C_IN, C_OUT, NODE = 2, 4, 8, 16

    key = jax.random.PRNGKey(0)
    kx, kw1, kb1, kw2, kb2 = jax.random.split(key, 5)

    x = jax.random.normal(kx, (B, C_IN, NODE, NODE), dtype=jnp.float32)

    # Deterministic parameter init (PyTorch conv shapes, squeezed):
    #   conv1xd.weight (O, C, d, 1) -> (O, C, d);  convdx1.weight (O, C, 1, d) -> (O, C, d)
    fan_in = C_IN * NODE
    scale = 1.0 / jnp.sqrt(jnp.float32(fan_in))
    W1 = jax.random.uniform(kw1, (C_OUT, C_IN, NODE), jnp.float32, -scale, scale)
    b1 = jax.random.uniform(kb1, (C_OUT,), jnp.float32, -scale, scale)
    W2 = jax.random.uniform(kw2, (C_OUT, C_IN, NODE), jnp.float32, -scale, scale)
    b2 = jax.random.uniform(kb2, (C_OUT,), jnp.float32, -scale, scale)

    ref = e2e_reference(x, W1, b1, W2, b2, NODE)

    # 1) Full-precision path (matches the PyTorch module exactly).
    out = e2e_forward(x, W1, b1, W2, b2, NODE)
    out = jax.block_until_ready(out)
    assert out.shape == (B, C_OUT, NODE, NODE)
    max_err = float(jnp.max(jnp.abs(out - ref)))
    assert max_err < 1e-4, f"f32 mismatch vs reference: {max_err}"

    # 2) bf16-operand path (native-dtype A, bf16 MXU operands, f32 accumulation).
    out_bf = e2e_forward(x.astype(jnp.bfloat16), W1, b1, W2, b2, NODE,
                         compute_dtype=jnp.bfloat16)
    out_bf = jax.block_until_ready(out_bf)
    max_err_bf = float(jnp.max(jnp.abs(out_bf - ref)))
    assert max_err_bf < 1e-1, f"bf16 mismatch vs reference: {max_err_bf}"

    print("KERNEL_OK")
</pallas_src>

<mosaic_0001>
module attributes {stable_mosaic.version = 11 : i64} {
  func.func @e2e_kernel(%arg0: i32, %arg1: i32, %arg2: memref<8x1xf32, #tpu.memory_space<vmem>>, %arg3: memref<4x8x16xf32, #tpu.memory_space<vmem>>, %arg4: memref<4x8x16xf32, #tpu.memory_space<vmem>>, %arg5: memref<1x4x16x16xf32, #tpu.memory_space<vmem>>, %arg6: memref<1x8x16x16xf32, #tpu.memory_space<vmem>>) attributes {dimension_semantics = [#tpu.dimension_semantics<parallel>, #tpu.dimension_semantics<parallel>], iteration_bounds = array<i64: 2, 1>, scalar_prefetch = 0 : i64, scratch_operands = 0 : i64, tpu.core_type = #tpu.core_type<tc>, window_params = [{transform_indices = @transform_0, window_bounds = array<i64: 8, 1>}, {transform_indices = @transform_1, window_bounds = array<i64: 4, 8, 16>}, {transform_indices = @transform_2, window_bounds = array<i64: 4, 8, 16>}, {transform_indices = @transform_3, window_bounds = array<i64: 1, 4, 16, 16>}, {transform_indices = @transform_4, window_bounds = array<i64: 1, 8, 16, 16>}]} {
    %c0 = arith.constant 0 : index
    %c0_0 = arith.constant 0 : index
    %c0_1 = arith.constant 0 : index
    %c0_2 = arith.constant 0 : index
    %0 = vector.load %arg5[%c0, %c0_0, %c0_1, %c0_2] : memref<1x4x16x16xf32, #tpu.memory_space<vmem>>, vector<1x4x16x16xf32>
    %1 = vector.shape_cast %0 : vector<1x4x16x16xf32> to vector<4x16x16xf32>
    %c0_3 = arith.constant 0 : index
    %c0_4 = arith.constant 0 : index
    %c0_5 = arith.constant 0 : index
    %2 = vector.load %arg3[%c0_3, %c0_4, %c0_5] : memref<4x8x16xf32, #tpu.memory_space<vmem>>, vector<4x8x16xf32>
    "tpu.trace_start"() <{level = 10 : i32, message = "cok,ckj->coj"}> : () -> ()
    %cst = arith.constant dense<0.000000e+00> : vector<4x8x16xf32>
    %3 = tpu.matmul %2, %1, %cst {dimension_numbers = #tpu.dot_dimension_numbers<[2], [1], [1], [2], [0, 0, 0, 1, 1, 2], [0], [0]>} : vector<4x8x16xf32>, vector<4x16x16xf32>, vector<4x8x16xf32> -> vector<4x8x16xf32>
    "tpu.trace_stop"() : () -> ()
    %cst_6 = arith.constant dense<0.000000e+00> : vector<8x16xf32>
    %4 = vector.multi_reduction <add>, %3, %cst_6 [0] : vector<4x8x16xf32> to vector<8x16xf32>
    %c0_7 = arith.constant 0 : index
    %c0_8 = arith.constant 0 : index
    %5 = vector.load %arg2[%c0_7, %c0_8] : memref<8x1xf32, #tpu.memory_space<vmem>>, vector<8x1xf32>
    %6 = vector.broadcast %5 : vector<8x1xf32> to vector<8x16xf32>
    %7 = arith.addf %4, %6 : vector<8x16xf32>
    %c0_9 = arith.constant 0 : index
    %c0_10 = arith.constant 0 : index
    %c0_11 = arith.constant 0 : index
    %8 = vector.load %arg4[%c0_9, %c0_10, %c0_11] : memref<4x8x16xf32, #tpu.memory_space<vmem>>, vector<4x8x16xf32>
    "tpu.trace_start"() <{level = 10 : i32, message = "cok,cik->coi"}> : () -> ()
    %cst_12 = arith.constant dense<0.000000e+00> : vector<4x8x16xf32>
    %9 = tpu.matmul %8, %1, %cst_12 {dimension_numbers = #tpu.dot_dimension_numbers<[2], [2], [1], [1], [0, 0, 0, 1, 1, 1], [0], [0]>} : vector<4x8x16xf32>, vector<4x16x16xf32>, vector<4x8x16xf32> -> vector<4x8x16xf32>
    "tpu.trace_stop"() : () -> ()
    %cst_13 = arith.constant dense<0.000000e+00> : vector<8x16xf32>
    %10 = vector.multi_reduction <add>, %9, %cst_13 [0] : vector<4x8x16xf32> to vector<8x16xf32>
    %11 = vector.shape_cast %10 : vector<8x16xf32> to vector<8x16x1xf32>
    %12 = vector.shape_cast %7 : vector<8x16xf32> to vector<8x1x16xf32>
    %13 = vector.broadcast %11 : vector<8x16x1xf32> to vector<8x16x16xf32>
    %14 = vector.broadcast %12 : vector<8x1x16xf32> to vector<8x16x16xf32>
    %15 = arith.addf %13, %14 : vector<8x16x16xf32>
    %c0_14 = arith.constant 0 : index
    %c0_15 = arith.constant 0 : index
    %c0_16 = arith.constant 0 : index
    %c0_17 = arith.constant 0 : index
    %16 = vector.load %arg6[%c0_14, %c0_15, %c0_16, %c0_17] : memref<1x8x16x16xf32, #tpu.memory_space<vmem>>, vector<1x8x16x16xf32>
    %17 = vector.shape_cast %16 : vector<1x8x16x16xf32> to vector<8x16x16xf32>
    %18 = vector.shape_cast %15 : vector<8x16x16xf32> to vector<1x8x16x16xf32>
    tpu.vector_store %arg6[%c0_14, %c0_15, %c0_16, %c0_17], %18 {strides = array<i32>} : memref<1x8x16x16xf32, #tpu.memory_space<vmem>>, vector<1x8x16x16xf32>,
    return
  }
  func.func @transform_0(%arg0: i32, %arg1: i32) -> (i32, i32) {
    %c0_i32 = arith.constant 0 : i32
    %c0_i32_0 = arith.constant 0 : i32
    return %arg1, %c0_i32 : i32, i32
  }
  func.func @transform_1(%arg0: i32, %arg1: i32) -> (i32, i32, i32) {
    %c0_i32 = arith.constant 0 : i32
    %c0_i32_0 = arith.constant 0 : i32
    %c0_i32_1 = arith.constant 0 : i32
    return %c0_i32, %arg1, %c0_i32_0 : i32, i32, i32
  }
  func.func @transform_2(%arg0: i32, %arg1: i32) -> (i32, i32, i32) {
    %c0_i32 = arith.constant 0 : i32
    %c0_i32_0 = arith.constant 0 : i32
    %c0_i32_1 = arith.constant 0 : i32
    return %c0_i32, %arg1, %c0_i32_0 : i32, i32, i32
  }
  func.func @transform_3(%arg0: i32, %arg1: i32) -> (i32, i32, i32, i32) {
    %c0_i32 = arith.constant 0 : i32
    %c0_i32_0 = arith.constant 0 : i32
    %c0_i32_1 = arith.constant 0 : i32
    %c0_i32_2 = arith.constant 0 : i32
    return %arg0, %c0_i32, %c0_i32_0, %c0_i32_1 : i32, i32, i32, i32
  }
  func.func @transform_4(%arg0: i32, %arg1: i32) -> (i32, i32, i32, i32) {
    %c0_i32 = arith.constant 0 : i32
    %c0_i32_0 = arith.constant 0 : i32
    %c0_i32_1 = arith.constant 0 : i32
    return %arg0, %arg1, %c0_i32, %c0_i32_0 : i32, i32, i32, i32
  }
}

</mosaic_0001>

<llo_original>
// kernel: tpu_custom_call.1
$region0: #{tpu_custom_call.1}
  #allocation0 [shape = 'u32[]', space=smem, size = 0x4, offset = 0x4, fixed_abs, tag = 'smem constant byte address 0x4 - core index']
  #allocation1 [shape = 'u32[144,128]{1,0:T(1,128)}', space=vmem, size = 0x12000, scoped, tag = 'internal scratch']
  %s0 = inlined_call_operand.vmem [shape: f32[8,1], index: 0, kind: input, shape index: {}]
  %s1 = inlined_call_operand.hbm [shape: f32[4,8,16], index: 1, kind: input, shape index: {}]
  %s2 = inlined_call_operand.hbm [shape: f32[4,8,16], index: 2, kind: input, shape index: {}]
  %s3 = inlined_call_operand.hbm [shape: f32[2,4,16,16], index: 3, kind: input, shape index: {}]
  %s4 = inlined_call_operand.hbm [shape: f32[2,8,16,16], index: 4, kind: output, shape index: {}]
  %s5 = sld [smem:[#allocation0]]
  $region61: #{tpu_custom_call.1} parent=0
    _
  %s7 = ssub.s32 1, %s5
  %s8 = scalar_select 0, %s7, %s5
  $region1: #{tpu_custom_call.1} parent=0
    #allocation2 [shape = 'u8[16384]{0}', space=vmem, size = 0x4000, scoped, tag = 'input window, operand 1, single buffered']
    #allocation3 [shape = 's32[2]{0}', space=sflag, size = 0x8, scoped, tag = 'scoped memory for tpu_custom_call.1']
    #allocation4 [shape = 's32[2]{0}', space=sflag, size = 0x8, scoped, tag = 'scoped memory for tpu_custom_call.1']
    #allocation5 [shape = 'u8[16384]{0}', space=vmem, size = 0x4000, scoped, tag = 'input window, operand 2, single buffered']
    #allocation6 [shape = 's32[1]{0}', space=sflag, size = 0x4, scoped, tag = 'scoped memory for tpu_custom_call.1']
    #allocation7 [shape = 'u8[65536]{0}', space=vmem, size = 0x10000, scoped, tag = 'input window, operand 3']
    #allocation8 [shape = 'u8[131072]{0}', space=vmem, size = 0x20000, scoped, tag = 'output window, operand 0']
    %9 = vsyncpa [#allocation3], 0
    %10 = vsyncpa [#allocation6], 0
    %11 = vsyncpa [#allocation4], 0
    %s12 = scalar_lea.sflag [#allocation4], 1
    %13 = vsyncpa %s12, 0
    loop: start=0, step=1, limit=4
    $region2: #{tpu_custom_call.1} parent=1 // loop_pre_header
      _
    $region3: #{tpu_custom_call.1} parent=1 // loop_header
      %s15 = sphi 0, %s19
      %p16 = scmp.ge.s32.totalorder %s15, 4
      %s22 = sphi 0, %s34
      %s23 = sphi 0, %s30
      %s24 = sphi 0, %s22
      %s25 = sphi 0, %s23
      %s26 = sphi 0, %s24
      %s27 = sphi 0, %s25
      %s37 = sphi 0, %s39
      %s40 = sphi 0, %s37
      %s41 = sphi 0, %s40
      %s57 = sphi 0, %s41
      %s63 = sphi 0, %s65
      %s66 = sphi 0, %s63
      %s67 = sphi 0, %s66
      %s83 = sphi 0, %s67
      %s89 = sphi 0, %s91
      %s92 = sphi 0, %s89
      %s93 = sphi 0, %s92
      %s109 = sphi 0, %s93
      %s115 = sphi 0, %s117
      %s118 = sphi 0, %s115
      %s119 = sphi 0, %s118
      %s135 = sphi 0, %s119
      %s143 = sphi 0, %s145
      %s146 = sphi 0, %s143
      %s147 = sphi 0, %s146
      %s163 = sphi 0, %s147
    $region4: #{tpu_custom_call.1} parent=1 // loop_header_branch
      %18 = sbr.rel (%p16) target = $region8
    $region5: #{tpu_custom_call.1} parent=1 // loop_body
      %s20 = ssub.s32 %s15, 1
      %s21 = ssub.s32 %s15, 2
      %s28 = sadd.s32 1, %s23
      %p29 = scmp.ge.s32.totalorder %s28, 1
      %s30 = scalar_select %p29, 0, %s28
      %s31 = sadd.s32 1, %s22
      %s32 = scalar_select %p29, %s31, %s22
      %p33 = scmp.ge.s32.totalorder %s32, 2
      %s34 = scalar_select %p33, 0, %s32
      %s35 = ssub.s32 %s23, %s30
      %p36 = scmp.eq.s32.totalorder %s35, 0
      %s38 = sadd.s32 %s37, 1
      %s39 = scalar_select %p36, %s37, %s38
      %p42 = pneg %p36
      %p43 = scmp.eq.s32.totalorder %s15, 1
      %p44 = por %p42, %p43
      %p45 = scmp.ne.s32.totalorder %s37, %s40
      %p46 = scmp.eq.s32.totalorder %s15, 0
      %p47 = por %p45, %p46
      %p48 = scmp.ne.s32.totalorder %s37, %s40
      %p49 = scmp.eq.s32.totalorder %s20, 1
      %p50 = por %p48, %p49
      %p51 = scmp.ne.s32.totalorder %s40, %s41
      %p52 = scmp.eq.s32.totalorder %s20, 0
      %p53 = por %p51, %p52
      %p54 = scmp.ne.s32.totalorder %s40, %s41
      %p55 = scmp.eq.s32.totalorder %s21, 1
      %p56 = por %p54, %p55
      %p58 = scmp.ne.s32.totalorder %s41, %s57
      %p59 = scmp.eq.s32.totalorder %s21, 0
      %p60 = por %p58, %p59
      %s61 = ssub.s32 %s23, %s30
      %p62 = scmp.eq.s32.totalorder %s61, 0
      %s64 = sadd.s32 %s63, 1
      %s65 = scalar_select %p62, %s63, %s64
      %p68 = pneg %p62
      %p69 = scmp.eq.s32.totalorder %s15, 1
      %p70 = por %p68, %p69
      %p71 = scmp.ne.s32.totalorder %s63, %s66
      %p72 = scmp.eq.s32.totalorder %s15, 0
      %p73 = por %p71, %p72
      %p74 = scmp.ne.s32.totalorder %s63, %s66
      %p75 = scmp.eq.s32.totalorder %s20, 1
      %p76 = por %p74, %p75
      %p77 = scmp.ne.s32.totalorder %s66, %s67
      %p78 = scmp.eq.s32.totalorder %s20, 0
      %p79 = por %p77, %p78
      %p80 = scmp.ne.s32.totalorder %s66, %s67
      %p81 = scmp.eq.s32.totalorder %s21, 1
      %p82 = por %p80, %p81
      %p84 = scmp.ne.s32.totalorder %s67, %s83
      %p85 = scmp.eq.s32.totalorder %s21, 0
      %p86 = por %p84, %p85
      %s87 = ssub.s32 %s23, %s30
      %p88 = scmp.eq.s32.totalorder %s87, 0
      %s90 = sadd.s32 %s89, 1
      %s91 = scalar_select %p88, %s89, %s90
      %p94 = pneg %p88
      %p95 = scmp.eq.s32.totalorder %s15, 1
      %p96 = por %p94, %p95
      %p97 = scmp.ne.s32.totalorder %s89, %s92
      %p98 = scmp.eq.s32.totalorder %s15, 0
      %p99 = por %p97, %p98
      %p100 = scmp.ne.s32.totalorder %s89, %s92
      %p101 = scmp.eq.s32.totalorder %s20, 1
      %p102 = por %p100, %p101
      %p103 = scmp.ne.s32.totalorder %s92, %s93
      %p104 = scmp.eq.s32.totalorder %s20, 0
      %p105 = por %p103, %p104
      %p106 = scmp.ne.s32.totalorder %s92, %s93
      %p107 = scmp.eq.s32.totalorder %s21, 1
      %p108 = por %p106, %p107
      %p110 = scmp.ne.s32.totalorder %s93, %s109
      %p111 = scmp.eq.s32.totalorder %s21, 0
      %p112 = por %p110, %p111
      %s113 = ssub.s32 %s22, %s34
      %p114 = scmp.eq.s32.totalorder %s113, 0
      %s116 = sadd.s32 %s115, 1
      %s117 = scalar_select %p114, %s115, %s116
      %p120 = pneg %p114
      %p121 = scmp.eq.s32.totalorder %s15, 1
      %p122 = por %p120, %p121
      %p123 = scmp.ne.s32.totalorder %s115, %s118
      %p124 = scmp.eq.s32.totalorder %s15, 0
      %p125 = por %p123, %p124
      %p126 = scmp.ne.s32.totalorder %s115, %s118
      %p127 = scmp.eq.s32.totalorder %s20, 1
      %p128 = por %p126, %p127
      %p129 = scmp.ne.s32.totalorder %s118, %s119
      %p130 = scmp.eq.s32.totalorder %s20, 0
      %p131 = por %p129, %p130
      %p132 = scmp.ne.s32.totalorder %s118, %s119
      %p133 = scmp.eq.s32.totalorder %s21, 1
      %p134 = por %p132, %p133
      %p136 = scmp.ne.s32.totalorder %s119, %s135
      %p137 = scmp.eq.s32.totalorder %s21, 0
      %p138 = por %p136, %p137
      %s139 = ssub.s32 %s22, %s34
      %s140 = ssub.s32 %s23, %s30
      %s141 = sor.u32 %s139, %s140
      %p142 = scmp.eq.s32.totalorder %s141, 0
      %s144 = sadd.s32 %s143, 1
      %s145 = scalar_select %p142, %s143, %s144
      %p148 = pneg %p142
      %p149 = scmp.eq.s32.totalorder %s15, 1
      %p150 = por %p148, %p149
      %p151 = scmp.ne.s32.totalorder %s143, %s146
      %p152 = scmp.eq.s32.totalorder %s15, 0
      %p153 = por %p151, %p152
      %p154 = scmp.ne.s32.totalorder %s143, %s146
      %p155 = scmp.eq.s32.totalorder %s20, 1
      %p156 = por %p154, %p155
      %p157 = scmp.ne.s32.totalorder %s146, %s147
      %p158 = scmp.eq.s32.totalorder %s20, 0
      %p159 = por %p157, %p158
      %p160 = scmp.ne.s32.totalorder %s146, %s147
      %p161 = scmp.eq.s32.totalorder %s21, 1
      %p162 = por %p160, %p161
      %p164 = scmp.ne.s32.totalorder %s147, %s163
      %p165 = scmp.eq.s32.totalorder %s21, 0
      %p166 = por %p164, %p165
      %p167 = scmp.le.s32.totalorder 1, %s15
      %p168 = scmp.lt.s32.totalorder %s15, 3
      %p169 = pnand %p167, %p168
      %p170 = pneg %p169
      // Predicated region
      $region9: #{tpu_custom_call.1} parent=5 // pred_check
        _
      $region10: #{tpu_custom_call.1} parent=5 // pred_check_branch
        %172 = sbr.rel (%p169) target = $region12
      $region11: #{tpu_custom_call.1} parent=5 // pred_region
        %s173 = ssub.s32 %s15, 1
        // Predicated region
        $region13: #{tpu_custom_call.1} parent=11 // pred_check
          %p174 = pneg %p53
        $region14: #{tpu_custom_call.1} parent=11 // pred_check_branch
          %176 = sbr.rel (%p174) target = $region16
        $region15: #{tpu_custom_call.1} parent=11 // pred_region
          %p177 = scmp.lt.s32.totalorder %s25, 0
          %s178 = scalar_select %p177, %s25, 0
          %s179 = smul.addr %s178, 8
          %s180 = scalar_lea.vmem %s0, %s179
        $region16: #{tpu_custom_call.1} parent=11 // pred_fallthru
          _
        // Predicated region
        $region17: #{tpu_custom_call.1} parent=11 // pred_check
          %p181 = pneg %p79
        $region18: #{tpu_custom_call.1} parent=11 // pred_check_branch
          %183 = sbr.rel (%p181) target = $region20
        $region19: #{tpu_custom_call.1} parent=11 // pred_region
          %s185 = ssub.s32 512, 512
          %186 = vsyncadd [#allocation3], %s185
          %s187 = smul.addr %s25, 128
          %s188 = scalar_lea.hbm %s1, %s187
          %s189 = sshll.u32 [#allocation2], 4
          %s190 = int_to_ptr.vmem [resolvable:$true] %s189
          %195 = dma.hbm_to_vmem [thread:$0]  %s188, 512, %s190, [#allocation3], 128, 128, 8
        $region20: #{tpu_custom_call.1} parent=11 // pred_fallthru
          _
        // Predicated region
        $region21: #{tpu_custom_call.1} parent=11 // pred_check
          %p196 = pneg %p105
        $region22: #{tpu_custom_call.1} parent=11 // pred_check_branch
          %198 = sbr.rel (%p196) target = $region24
        $region23: #{tpu_custom_call.1} parent=11 // pred_region
          %s200 = ssub.s32 512, 512
          %201 = vsyncadd [#allocation6], %s200
          %s202 = smul.addr %s25, 128
          %s203 = scalar_lea.hbm %s2, %s202
          %s204 = sshll.u32 [#allocation5], 4
          %s205 = int_to_ptr.vmem [resolvable:$true] %s204
          %210 = dma.hbm_to_vmem [thread:$0]  %s203, 512, %s205, [#allocation6], 128, 128, 8
        $region24: #{tpu_custom_call.1} parent=11 // pred_fallthru
          _
      $region12: #{tpu_custom_call.1} parent=5 // pred_fallthru
        _
      %p211 = scmp.lt.s32.totalorder %s15, 2
      // Predicated region
      $region25: #{tpu_custom_call.1} parent=5 // pred_check
        %p212 = pneg %p211
      $region26: #{tpu_custom_call.1} parent=5 // pred_check_branch
        %214 = sbr.rel (%p212) target = $region28
      $region27: #{tpu_custom_call.1} parent=5 // pred_region
        // Predicated region
        $region29: #{tpu_custom_call.1} parent=27 // pred_check
          %p215 = pneg %p125
        $region30: #{tpu_custom_call.1} parent=27 // pred_check_branch
          %217 = sbr.rel (%p215) target = $region32
        $region31: #{tpu_custom_call.1} parent=27 // pred_region
          %s218 = sand.u32 %s15, 1
          %s219 = scalar_lea.sflag [#allocation3], %s218
          %s220 = sand.u32 %s115, 1
          %s221 = smul.addr %s220, 64
          %s222 = scalar_lea.vmem [#allocation7], %s221
          %s224 = ssub.s32 1024, 1024
          %225 = vsyncadd %s219, %s224
          %s226 = smul.addr %s22, 8
          %s227 = smul.addr %s226, 128
          %s228 = scalar_lea.hbm %s3, %s227
          %s229 = sshll.u32 %s222, 4
          %s230 = int_to_ptr.vmem [resolvable:$true] %s229
          %235 = dma.hbm_to_vmem [thread:$0]  %s228, 1024, %s230, %s219, 128, 128, 8
        $region32: #{tpu_custom_call.1} parent=27 // pred_fallthru
          _
      $region28: #{tpu_custom_call.1} parent=5 // pred_fallthru
        _
      %p236 = scmp.le.s32.totalorder 1, %s15
      %p237 = scmp.lt.s32.totalorder %s15, 3
      %p238 = pnand %p236, %p237
      %p239 = pneg %p238
      // Predicated region
      $region33: #{tpu_custom_call.1} parent=5 // pred_check
        _
      $region34: #{tpu_custom_call.1} parent=5 // pred_check_branch
        %241 = sbr.rel (%p238) target = $region36
      $region35: #{tpu_custom_call.1} parent=5 // pred_region
        %s242 = ssub.s32 %s15, 1
        // Predicated region
        $region37: #{tpu_custom_call.1} parent=35 // pred_check
          %p243 = pneg %p79
        $region38: #{tpu_custom_call.1} parent=35 // pred_check_branch
          %245 = sbr.rel (%p243) target = $region40
        $region39: #{tpu_custom_call.1} parent=35 // pred_region
          %246 = dma.done [#allocation3], 512
        $region40: #{tpu_custom_call.1} parent=35 // pred_fallthru
          _
        // Predicated region
        $region41: #{tpu_custom_call.1} parent=35 // pred_check
          %p247 = pneg %p105
        $region42: #{tpu_custom_call.1} parent=35 // pred_check_branch
          %249 = sbr.rel (%p247) target = $region44
        $region43: #{tpu_custom_call.1} parent=35 // pred_region
          %250 = dma.done [#allocation6], 512
        $region44: #{tpu_custom_call.1} parent=35 // pred_fallthru
          _
        %s251 = sand.u32 %s20, 1
        %s252 = scalar_lea.sflag [#allocation3], %s251
        %s253 = sand.u32 %s118, 1
        %s254 = smul.addr %s253, 64
        %s255 = scalar_lea.vmem [#allocation7], %s254
        // Predicated region
        $region45: #{tpu_custom_call.1} parent=35 // pred_check
          %p256 = pneg %p131
        $region46: #{tpu_custom_call.1} parent=35 // pred_check_branch
          %258 = sbr.rel (%p256) target = $region48
        $region47: #{tpu_custom_call.1} parent=35 // pred_region
          %259 = dma.done %s252, 1024
        $region48: #{tpu_custom_call.1} parent=35 // pred_fallthru
          _
        %p260 = scmp.lt.s32.totalorder %s25, 0
        %s261 = scalar_select %p260, %s25, 0
        %s262 = smul.addr %s261, 8
        %s263 = scalar_lea.vmem %s0, %s262
        %p264 = pneg %p53
        %p265 = pneg %p50
        %p266 = pneg %p79
        %p267 = pneg %p76
        %p268 = pneg %p105
        %p269 = pneg %p102
        %s270 = sand.u32 %s20, 1
        %s271 = scalar_lea.sflag [#allocation3], %s270
        %s272 = sand.u32 %s118, 1
        %s273 = smul.addr %s272, 64
        %s274 = scalar_lea.vmem [#allocation7], %s273
        %p275 = pneg %p131
        %p276 = pneg %p128
        %p277 = pneg %p159
        %p278 = pneg %p156
        %s279 = sand.u32 %s146, 1
        %s280 = scalar_lea.sflag [#allocation4], %s279
        %s281 = sand.u32 %s146, 1
        %s282 = smul.addr %s281, 128
        %s283 = scalar_lea.vmem [#allocation8], %s282
        %p284 = scmp.lt.s32.totalorder %s25, 0
        %s285 = scalar_select %p284, %s25, 0
        %s286 = smul.addr %s285, 8
        %s287 = scalar_lea.vmem %s0, %s286
        %s288 = smul.u32 8, %s25
        %v289 = vld [vmem:[%s255] sm:$0xff]
        %v290 = vld [vmem:[%s255 + $0x8] sm:$0xff]
        %v291 = vld [vmem:[%s255 + $0x10] sm:$0xff]
        %v292 = vld [vmem:[%s255 + $0x18] sm:$0xff]
        %v293 = vld [vmem:[%s255 + $0x20] sm:$0xff]
        %v294 = vld [vmem:[%s255 + $0x28] sm:$0xff]
        %v295 = vld [vmem:[%s255 + $0x30] sm:$0xff]
        %v296 = vld [vmem:[%s255 + $0x38] sm:$0xff]
        %v297 = vld [vmem:[#allocation2] sm:$0xff]
        %v298 = vld [vmem:[#allocation2 + $0x8] sm:$0xff]
        %v299 = vld [vmem:[#allocation2 + $0x10] sm:$0xff]
        %v300 = vld [vmem:[#allocation2 + $0x18] sm:$0xff]
        %vm301 = vcmask 130048
        %v303 = vsel %vm301, %v297, 0
        %305 = vmatprep.subr.mxu0 0.0
        %306 = vmatpush1.msra.mxu0 %v289
        %307 = vmatprep.subr.mxu0 0.0
        %308 = vmatpush1.msra.mxu0 %v290
        %309 = vmatprep.subr.mxu0 0.0
        %310 = vmatpush1.msra.mxu0 0.0
        %311 = vmatprep.subr.mxu0 0.0
        %312 = vmatpush1.msra.mxu0 0.0
        %313 = vmatprep.subr.mxu0 0.0
        %314 = vmatpush1.msra.mxu0 0.0
        %315 = vmatprep.subr.mxu0 0.0
        %316 = vmatpush1.msra.mxu0 0.0
        %317 = vmatprep.subr.mxu0 0.0
        %318 = vmatpush1.msra.mxu0 0.0
        %319 = vmatprep.subr.mxu0 0.0
        %320 = vmatpush1.msra.mxu0 0.0
        %321 = vmatprep.subr.mxu0 0.0
        %322 = vmatpush1.msra.mxu0 0.0
        %323 = vmatprep.subr.mxu0 0.0
        %324 = vmatpush1.msra.mxu0 0.0
        %325 = vmatprep.subr.mxu0 0.0
        %326 = vmatpush1.msra.mxu0 0.0
        %327 = vmatprep.subr.mxu0 0.0
        %328 = vmatpush1.msra.mxu0 0.0
        %329 = vmatprep.subr.mxu0 0.0
        %330 = vmatpush1.msra.mxu0 0.0
        %331 = vmatprep.subr.mxu0 0.0
        %332 = vmatpush1.msra.mxu0 0.0
        %333 = vmatprep.subr.mxu0 0.0
        %334 = vmatpush1.msra.mxu0 0.0
        %335 = vmatprep.subr.mxu0 0.0
        %336 = vmatpush1.msra.mxu0 0.0
        %337 = vmatprep.subr.mxu0 0.0
        %338 = vmatpush1.msra.mxu0 0.0
        %339 = vmatprep.subr.mxu0 0.0
        %340 = vmatpush1.msra.mxu0 0.0
        %341 = vmatprep.subr.mxu0 0.0
        %342 = vmatpush1.msra.mxu0 0.0
        %343 = vmatprep.subr.mxu0 0.0
        %344 = vmatpush1.msra.mxu0 0.0
        %345 = vmatprep.subr.mxu0 0.0
        %346 = vmatpush1.msra.mxu0 0.0
        %347 = vmatprep.subr.mxu0 0.0
        %348 = vmatpush1.msra.mxu0 0.0
        %349 = vmatprep.subr.mxu0 0.0
        %350 = vmatpush1.msra.mxu0 0.0
        %351 = vmatprep.subr.mxu0 0.0
        %352 = vmatpush1.msra.mxu0 0.0
        %353 = vmatprep.subr.mxu0 0.0
        %354 = vmatpush1.msra.mxu0 0.0
        %355 = vmatprep.subr.mxu0 0.0
        %356 = vmatpush1.msra.mxu0 0.0
        %357 = vmatprep.subr.mxu0 0.0
        %358 = vmatpush1.msra.mxu0 0.0
        %359 = vmatprep.subr.mxu0 0.0
        %360 = vmatpush1.msra.mxu0 0.0
        %361 = vmatprep.subr.mxu0 0.0
        %362 = vmatpush1.msra.mxu0 0.0
        %363 = vmatprep.subr.mxu0 0.0
        %364 = vmatpush1.msra.mxu0 0.0
        %365 = vmatprep.subr.mxu0 0.0
        %366 = vmatpush1.msra.mxu0 0.0
        %367 = vmatprep.subr.mxu0 0.0
        %368 = vmatpush1.msra.mxu0 0.0
        %369 = vmatprep.mubr.f32.mxu0 0.0
        %370 = vmatmul.mubr.f32.gmra.mrb[0].mxu0 %v303
        %v371 = vpop.f32.mrb[0].mxu0
        %v372 = vadd.f32 0.0, %v371
        %v373 = vpop.f32.mrb[0].mxu0
        %374 = vdwg.mxu0
        %v376 = vsel %vm301, %v298, 0
        %378 = vmatprep.subr.mxu0 0.0
        %379 = vmatpush1.msra.mxu0 %v291
        %380 = vmatprep.subr.mxu0 0.0
        %381 = vmatpush1.msra.mxu0 %v292
        %382 = vmatprep.subr.mxu0 0.0
        %383 = vmatpush1.msra.mxu0 0.0
        %384 = vmatprep.subr.mxu0 0.0
        %385 = vmatpush1.msra.mxu0 0.0
        %386 = vmatprep.subr.mxu0 0.0
        %387 = vmatpush1.msra.mxu0 0.0
        %388 = vmatprep.subr.mxu0 0.0
        %389 = vmatpush1.msra.mxu0 0.0
        %390 = vmatprep.subr.mxu0 0.0
        %391 = vmatpush1.msra.mxu0 0.0
        %392 = vmatprep.subr.mxu0 0.0
        %393 = vmatpush1.msra.mxu0 0.0
        %394 = vmatprep.subr.mxu0 0.0
        %395 = vmatpush1.msra.mxu0 0.0
        %396 = vmatprep.subr.mxu0 0.0
        %397 = vmatpush1.msra.mxu0 0.0
        %398 = vmatprep.subr.mxu0 0.0
        %399 = vmatpush1.msra.mxu0 0.0
        %400 = vmatprep.subr.mxu0 0.0
        %401 = vmatpush1.msra.mxu0 0.0
        %402 = vmatprep.subr.mxu0 0.0
        %403 = vmatpush1.msra.mxu0 0.0
        %404 = vmatprep.subr.mxu0 0.0
        %405 = vmatpush1.msra.mxu0 0.0
        %406 = vmatprep.subr.mxu0 0.0
        %407 = vmatpush1.msra.mxu0 0.0
        %408 = vmatprep.subr.mxu0 0.0
        %409 = vmatpush1.msra.mxu0 0.0
        %410 = vmatprep.subr.mxu0 0.0
        %411 = vmatpush1.msra.mxu0 0.0
        %412 = vmatprep.subr.mxu0 0.0
        %413 = vmatpush1.msra.mxu0 0.0
        %414 = vmatprep.subr.mxu0 0.0
        %415 = vmatpush1.msra.mxu0 0.0
        %416 = vmatprep.subr.mxu0 0.0
        %417 = vmatpush1.msra.mxu0 0.0
        %418 = vmatprep.subr.mxu0 0.0
        %419 = vmatpush1.msra.mxu0 0.0
        %420 = vmatprep.subr.mxu0 0.0
        %421 = vmatpush1.msra.mxu0 0.0
        %422 = vmatprep.subr.mxu0 0.0
        %423 = vmatpush1.msra.mxu0 0.0
        %424 = vmatprep.subr.mxu0 0.0
        %425 = vmatpush1.msra.mxu0 0.0
        %426 = vmatprep.subr.mxu0 0.0
        %427 = vmatpush1.msra.mxu0 0.0
        %428 = vmatprep.subr.mxu0 0.0
        %429 = vmatpush1.msra.mxu0 0.0
        %430 = vmatprep.subr.mxu0 0.0
        %431 = vmatpush1.msra.mxu0 0.0
        %432 = vmatprep.subr.mxu0 0.0
        %433 = vmatpush1.msra.mxu0 0.0
        %434 = vmatprep.subr.mxu0 0.0
        %435 = vmatpush1.msra.mxu0 0.0
        %436 = vmatprep.subr.mxu0 0.0
        %437 = vmatpush1.msra.mxu0 0.0
        %438 = vmatprep.subr.mxu0 0.0
        %439 = vmatpush1.msra.mxu0 0.0
        %440 = vmatprep.subr.mxu0 0.0
        %441 = vmatpush1.msra.mxu0 0.0
        %442 = vmatprep.mubr.f32.mxu0 0.0
        %443 = vmatmul.mubr.f32.gmra.mrb[0].mxu0 %v376
        %v444 = vpop.f32.mrb[0].mxu0
        %v445 = vadd.f32 0.0, %v444
        %v446 = vpop.f32.mrb[0].mxu0
        %447 = vdwg.mxu0
        %v449 = vsel %vm301, %v299, 0
        %451 = vmatprep.subr.mxu0 0.0
        %452 = vmatpush1.msra.mxu0 %v293
        %453 = vmatprep.subr.mxu0 0.0
        %454 = vmatpush1.msra.mxu0 %v294
        %455 = vmatprep.subr.mxu0 0.0
        %456 = vmatpush1.msra.mxu0 0.0
        %457 = vmatprep.subr.mxu0 0.0
        %458 = vmatpush1.msra.mxu0 0.0
        %459 = vmatprep.subr.mxu0 0.0
        %460 = vmatpush1.msra.mxu0 0.0
        %461 = vmatprep.subr.mxu0 0.0
        %462 = vmatpush1.msra.mxu0 0.0
        %463 = vmatprep.subr.mxu0 0.0
        %464 = vmatpush1.msra.mxu0 0.0
        %465 = vmatprep.subr.mxu0 0.0
        %466 = vmatpush1.msra.mxu0 0.0
        %467 = vmatprep.subr.mxu0 0.0
        %468 = vmatpush1.msra.mxu0 0.0
        %469 = vmatprep.subr.mxu0 0.0
        %470 = vmatpush1.msra.mxu0 0.0
        %471 = vmatprep.subr.mxu0 0.0
        %472 = vmatpush1.msra.mxu0 0.0
        %473 = vmatprep.subr.mxu0 0.0
        %474 = vmatpush1.msra.mxu0 0.0
        %475 = vmatprep.subr.mxu0 0.0
        %476 = vmatpush1.msra.mxu0 0.0
        %477 = vmatprep.subr.mxu0 0.0
        %478 = vmatpush1.msra.mxu0 0.0
        %479 = vmatprep.subr.mxu0 0.0
        %480 = vmatpush1.msra.mxu0 0.0
        %481 = vmatprep.subr.mxu0 0.0
        %482 = vmatpush1.msra.mxu0 0.0
        %483 = vmatprep.subr.mxu0 0.0
        %484 = vmatpush1.msra.mxu0 0.0
        %485 = vmatprep.subr.mxu0 0.0
        %486 = vmatpush1.msra.mxu0 0.0
        %487 = vmatprep.subr.mxu0 0.0
        %488 = vmatpush1.msra.mxu0 0.0
        %489 = vmatprep.subr.mxu0 0.0
        %490 = vmatpush1.msra.mxu0 0.0
        %491 = vmatprep.subr.mxu0 0.0
        %492 = vmatpush1.msra.mxu0 0.0
        %493 = vmatprep.subr.mxu0 0.0
        %494 = vmatpush1.msra.mxu0 0.0
        %495 = vmatprep.subr.mxu0 0.0
        %496 = vmatpush1.msra.mxu0 0.0
        %497 = vmatprep.subr.mxu0 0.0
        %498 = vmatpush1.msra.mxu0 0.0
        %499 = vmatprep.subr.mxu0 0.0
        %500 = vmatpush1.msra.mxu0 0.0
        %501 = vmatprep.subr.mxu0 0.0
        %502 = vmatpush1.msra.mxu0 0.0
        %503 = vmatprep.subr.mxu0 0.0
        %504 = vmatpush1.msra.mxu0 0.0
        %505 = vmatprep.subr.mxu0 0.0
        %506 = vmatpush1.msra.mxu0 0.0
        %507 = vmatprep.subr.mxu0 0.0
        %508 = vmatpush1.msra.mxu0 0.0
        %509 = vmatprep.subr.mxu0 0.0
        %510 = vmatpush1.msra.mxu0 0.0
        %511 = vmatprep.subr.mxu0 0.0
        %512 = vmatpush1.msra.mxu0 0.0
        %513 = vmatprep.subr.mxu0 0.0
        %514 = vmatpush1.msra.mxu0 0.0
        %515 = vmatprep.mubr.f32.mxu0 0.0
        %516 = vmatmul.mubr.f32.gmra.mrb[0].mxu0 %v449
        %v517 = vpop.f32.mrb[0].mxu0
        %v518 = vadd.f32 0.0, %v517
        %v519 = vpop.f32.mrb[0].mxu0
        %520 = vdwg.mxu0
        %v522 = vsel %vm301, %v300, 0
        %524 = vmatprep.subr.mxu0 0.0
        %525 = vmatpush1.msra.mxu0 %v295
        %526 = vmatprep.subr.mxu0 0.0
        %527 = vmatpush1.msra.mxu0 %v296
        %528 = vmatprep.subr.mxu0 0.0
        %529 = vmatpush1.msra.mxu0 0.0
        %530 = vmatprep.subr.mxu0 0.0
        %531 = vmatpush1.msra.mxu0 0.0
        %532 = vmatprep.subr.mxu0 0.0
        %533 = vmatpush1.msra.mxu0 0.0
        %534 = vmatprep.subr.mxu0 0.0
        %535 = vmatpush1.msra.mxu0 0.0
        %536 = vmatprep.subr.mxu0 0.0
        %537 = vmatpush1.msra.mxu0 0.0
        %538 = vmatprep.subr.mxu0 0.0
        %539 = vmatpush1.msra.mxu0 0.0
        %540 = vmatprep.subr.mxu0 0.0
        %541 = vmatpush1.msra.mxu0 0.0
        %542 = vmatprep.subr.mxu0 0.0
        %543 = vmatpush1.msra.mxu0 0.0
        %544 = vmatprep.subr.mxu0 0.0
        %545 = vmatpush1.msra.mxu0 0.0
        %546 = vmatprep.subr.mxu0 0.0
        %547 = vmatpush1.msra.mxu0 0.0
        %548 = vmatprep.subr.mxu0 0.0
        %549 = vmatpush1.msra.mxu0 0.0
        %550 = vmatprep.subr.mxu0 0.0
        %551 = vmatpush1.msra.mxu0 0.0
        %552 = vmatprep.subr.mxu0 0.0
        %553 = vmatpush1.msra.mxu0 0.0
        %554 = vmatprep.subr.mxu0 0.0
        %555 = vmatpush1.msra.mxu0 0.0
        %556 = vmatprep.subr.mxu0 0.0
        %557 = vmatpush1.msra.mxu0 0.0
        %558 = vmatprep.subr.mxu0 0.0
        %559 = vmatpush1.msra.mxu0 0.0
        %560 = vmatprep.subr.mxu0 0.0
        %561 = vmatpush1.msra.mxu0 0.0
        %562 = vmatprep.subr.mxu0 0.0
        %563 = vmatpush1.msra.mxu0 0.0
        %564 = vmatprep.subr.mxu0 0.0
        %565 = vmatpush1.msra.mxu0 0.0
        %566 = vmatprep.subr.mxu0 0.0
        %567 = vmatpush1.msra.mxu0 0.0
        %568 = vmatprep.subr.mxu0 0.0
        %569 = vmatpush1.msra.mxu0 0.0
        %570 = vmatprep.subr.mxu0 0.0
        %571 = vmatpush1.msra.mxu0 0.0
        %572 = vmatprep.subr.mxu0 0.0
        %573 = vmatpush1.msra.mxu0 0.0
        %574 = vmatprep.subr.mxu0 0.0
        %575 = vmatpush1.msra.mxu0 0.0
        %576 = vmatprep.subr.mxu0 0.0
        %577 = vmatpush1.msra.mxu0 0.0
        %578 = vmatprep.subr.mxu0 0.0
        %579 = vmatpush1.msra.mxu0 0.0
        %580 = vmatprep.subr.mxu0 0.0
        %581 = vmatpush1.msra.mxu0 0.0
        %582 = vmatprep.subr.mxu0 0.0
        %583 = vmatpush1.msra.mxu0 0.0
        %584 = vmatprep.subr.mxu0 0.0
        %585 = vmatpush1.msra.mxu0 0.0
        %586 = vmatprep.subr.mxu0 0.0
        %587 = vmatpush1.msra.mxu0 0.0
        %588 = vmatprep.mubr.f32.mxu0 0.0
        %589 = vmatmul.mubr.f32.gmra.mrb[0].mxu0 %v522
        %v590 = vpop.f32.mrb[0].mxu0
        %v591 = vadd.f32 0.0, %v590
        %v592 = vpop.f32.mrb[0].mxu0
        %593 = vdwg.mxu0
        %v594 = vsel %vm301, %v372, 0.0
        %v595 = vsel %vm301, %v445, 0.0
        %v596 = vadd.f32 %v594, %v595
        %v597 = vsel %vm301, %v518, 0.0
        %v598 = vadd.f32 %v596, %v597
        %v599 = vsel %vm301, %v591, 0.0
        %v600 = vadd.f32 %v598, %v599
        %v601 = vld [vmem:[%s287] sm:$0xff]
        %603 = vset.pattern.permute.xlu0 0
        %604 = vperm.xlu0 %603, %v601
        %v605 = vpop.permute.xlu0 %604
        %v607 = vadd.f32 %v600, %v605
        %v608 = vld [vmem:[#allocation5] sm:$0xff]
        %v609 = vld [vmem:[#allocation5 + $0x8] sm:$0xff]
        %v610 = vld [vmem:[#allocation5 + $0x10] sm:$0xff]
        %v611 = vld [vmem:[#allocation5 + $0x18] sm:$0xff]
        %v613 = vsel %vm301, %v608, 0
        %v616 = vsel %vm301, %v289, 0
        %v619 = vsel %vm301, %v290, 0
        %621 = vmatprep.subr.mxu0 0.0
        %622 = vmatpush1.xpose.msra.mxu0 %v616
        %623 = vmatprep.subr.mxu0 0.0
        %624 = vmatpush1.xpose.msra.mxu0 %v619
        %625 = vmatprep.subr.mxu0 0.0
        %626 = vmatpush1.xpose.msra.mxu0 0.0
        %627 = vmatprep.subr.mxu0 0.0
        %628 = vmatpush1.xpose.msra.mxu0 0.0
        %629 = vmatprep.subr.mxu0 0.0
        %630 = vmatpush1.xpose.msra.mxu0 0.0
        %631 = vmatprep.subr.mxu0 0.0
        %632 = vmatpush1.xpose.msra.mxu0 0.0
        %633 = vmatprep.subr.mxu0 0.0
        %634 = vmatpush1.xpose.msra.mxu0 0.0
        %635 = vmatprep.subr.mxu0 0.0
        %636 = vmatpush1.xpose.msra.mxu0 0.0
        %637 = vmatprep.subr.mxu0 0.0
        %638 = vmatpush1.xpose.msra.mxu0 0.0
        %639 = vmatprep.subr.mxu0 0.0
        %640 = vmatpush1.xpose.msra.mxu0 0.0
        %641 = vmatprep.subr.mxu0 0.0
        %642 = vmatpush1.xpose.msra.mxu0 0.0
        %643 = vmatprep.subr.mxu0 0.0
        %644 = vmatpush1.xpose.msra.mxu0 0.0
        %645 = vmatprep.subr.mxu0 0.0
        %646 = vmatpush1.xpose.msra.mxu0 0.0
        %647 = vmatprep.subr.mxu0 0.0
        %648 = vmatpush1.xpose.msra.mxu0 0.0
        %649 = vmatprep.subr.mxu0 0.0
        %650 = vmatpush1.xpose.msra.mxu0 0.0
        %651 = vmatprep.subr.mxu0 0.0
        %652 = vmatpush1.xpose.msra.mxu0 0.0
        %653 = vmatprep.subr.mxu0 0.0
        %654 = vmatpush1.xpose.msra.mxu0 0.0
        %655 = vmatprep.subr.mxu0 0.0
        %656 = vmatpush1.xpose.msra.mxu0 0.0
        %657 = vmatprep.subr.mxu0 0.0
        %658 = vmatpush1.xpose.msra.mxu0 0.0
        %659 = vmatprep.subr.mxu0 0.0
        %660 = vmatpush1.xpose.msra.mxu0 0.0
        %661 = vmatprep.subr.mxu0 0.0
        %662 = vmatpush1.xpose.msra.mxu0 0.0
        %663 = vmatprep.subr.mxu0 0.0
        %664 = vmatpush1.xpose.msra.mxu0 0.0
        %665 = vmatprep.subr.mxu0 0.0
        %666 = vmatpush1.xpose.msra.mxu0 0.0
        %667 = vmatprep.subr.mxu0 0.0
        %668 = vmatpush1.xpose.msra.mxu0 0.0
        %669 = vmatprep.subr.mxu0 0.0
        %670 = vmatpush1.xpose.msra.mxu0 0.0
        %671 = vmatprep.subr.mxu0 0.0
        %672 = vmatpush1.xpose.msra.mxu0 0.0
        %673 = vmatprep.subr.mxu0 0.0
        %674 = vmatpush1.xpose.msra.mxu0 0.0
        %675 = vmatprep.subr.mxu0 0.0
        %676 = vmatpush1.xpose.msra.mxu0 0.0
        %677 = vmatprep.subr.mxu0 0.0
        %678 = vmatpush1.xpose.msra.mxu0 0.0
        %679 = vmatprep.subr.mxu0 0.0
        %680 = vmatpush1.xpose.msra.mxu0 0.0
        %681 = vmatprep.subr.mxu0 0.0
        %682 = vmatpush1.xpose.msra.mxu0 0.0
        %683 = vmatprep.subr.mxu0 0.0
        %684 = vmatpush1.xpose.msra.mxu0 0.0
        %685 = vmatprep.mubr.f32.mxu0 0.0
        %686 = vmatmul.mubr.f32.gmra.mrb[0].mxu0 %v613
        %v687 = vpop.f32.mrb[0].mxu0
        %v688 = vadd.f32 0.0, %v687
        %v689 = vpop.f32.mrb[0].mxu0
        %690 = vdwg.mxu0
        %v692 = vsel %vm301, %v609, 0
        %v695 = vsel %vm301, %v291, 0
        %v698 = vsel %vm301, %v292, 0
        %700 = vmatprep.subr.mxu0 0.0
        %701 = vmatpush1.xpose.msra.mxu0 %v695
        %702 = vmatprep.subr.mxu0 0.0
        %703 = vmatpush1.xpose.msra.mxu0 %v698
        %704 = vmatprep.subr.mxu0 0.0
        %705 = vmatpush1.xpose.msra.mxu0 0.0
        %706 = vmatprep.subr.mxu0 0.0
        %707 = vmatpush1.xpose.msra.mxu0 0.0
        %708 = vmatprep.subr.mxu0 0.0
        %709 = vmatpush1.xpose.msra.mxu0 0.0
        %710 = vmatprep.subr.mxu0 0.0
        %711 = vmatpush1.xpose.msra.mxu0 0.0
        %712 = vmatprep.subr.mxu0 0.0
        %713 = vmatpush1.xpose.msra.mxu0 0.0
        %714 = vmatprep.subr.mxu0 0.0
        %715 = vmatpush1.xpose.msra.mxu0 0.0
        %716 = vmatprep.subr.mxu0 0.0
        %717 = vmatpush1.xpose.msra.mxu0 0.0
        %718 = vmatprep.subr.mxu0 0.0
        %719 = vmatpush1.xpose.msra.mxu0 0.0
        %720 = vmatprep.subr.mxu0 0.0
        %721 = vmatpush1.xpose.msra.mxu0 0.0
        %722 = vmatprep.subr.mxu0 0.0
        %723 = vmatpush1.xpose.msra.mxu0 0.0
        %724 = vmatprep.subr.mxu0 0.0
        %725 = vmatpush1.xpose.msra.mxu0 0.0
        %726 = vmatprep.subr.mxu0 0.0
        %727 = vmatpush1.xpose.msra.mxu0 0.0
        %728 = vmatprep.subr.mxu0 0.0
        %729 = vmatpush1.xpose.msra.mxu0 0.0
        %730 = vmatprep.subr.mxu0 0.0
        %731 = vmatpush1.xpose.msra.mxu0 0.0
        %732 = vmatprep.subr.mxu0 0.0
        %733 = vmatpush1.xpose.msra.mxu0 0.0
        %734 = vmatprep.subr.mxu0 0.0
        %735 = vmatpush1.xpose.msra.mxu0 0.0
        %736 = vmatprep.subr.mxu0 0.0
        %737 = vmatpush1.xpose.msra.mxu0 0.0
        %738 = vmatprep.subr.mxu0 0.0
        %739 = vmatpush1.xpose.msra.mxu0 0.0
        %740 = vmatprep.subr.mxu0 0.0
        %741 = vmatpush1.xpose.msra.mxu0 0.0
        %742 = vmatprep.subr.mxu0 0.0
        %743 = vmatpush1.xpose.msra.mxu0 0.0
        %744 = vmatprep.subr.mxu0 0.0
        %745 = vmatpush1.xpose.msra.mxu0 0.0
        %746 = vmatprep.subr.mxu0 0.0
        %747 = vmatpush1.xpose.msra.mxu0 0.0
        %748 = vmatprep.subr.mxu0 0.0
        %749 = vmatpush1.xpose.msra.mxu0 0.0
        %750 = vmatprep.subr.mxu0 0.0
        %751 = vmatpush1.xpose.msra.mxu0 0.0
        %752 = vmatprep.subr.mxu0 0.0
        %753 = vmatpush1.xpose.msra.mxu0 0.0
        %754 = vmatprep.subr.mxu0 0.0
        %755 = vmatpush1.xpose.msra.mxu0 0.0
        %756 = vmatprep.subr.mxu0 0.0
        %757 = vmatpush1.xpose.msra.mxu0 0.0
        %758 = vmatprep.subr.mxu0 0.0
        %759 = vmatpush1.xpose.msra.mxu0 0.0
        %760 = vmatprep.subr.mxu0 0.0
        %761 = vmatpush1.xpose.msra.mxu0 0.0
        %762 = vmatprep.subr.mxu0 0.0
        %763 = vmatpush1.xpose.msra.mxu0 0.0
        %764 = vmatprep.mubr.f32.mxu0 0.0
        %765 = vmatmul.mubr.f32.gmra.mrb[0].mxu0 %v692
        %v766 = vpop.f32.mrb[0].mxu0
        %v767 = vadd.f32 0.0, %v766
        %v768 = vpop.f32.mrb[0].mxu0
        %769 = vdwg.mxu0
        %v771 = vsel %vm301, %v610, 0
        %v774 = vsel %vm301, %v293, 0
        %v777 = vsel %vm301, %v294, 0
        %779 = vmatprep.subr.mxu0 0.0
        %780 = vmatpush1.xpose.msra.mxu0 %v774
        %781 = vmatprep.subr.mxu0 0.0
        %782 = vmatpush1.xpose.msra.mxu0 %v777
        %783 = vmatprep.subr.mxu0 0.0
        %784 = vmatpush1.xpose.msra.mxu0 0.0
        %785 = vmatprep.subr.mxu0 0.0
        %786 = vmatpush1.xpose.msra.mxu0 0.0
        %787 = vmatprep.subr.mxu0 0.0
        %788 = vmatpush1.xpose.msra.mxu0 0.0
        %789 = vmatprep.subr.mxu0 0.0
        %790 = vmatpush1.xpose.msra.mxu0 0.0
        %791 = vmatprep.subr.mxu0 0.0
        %792 = vmatpush1.xpose.msra.mxu0 0.0
        %793 = vmatprep.subr.mxu0 0.0
        %794 = vmatpush1.xpose.msra.mxu0 0.0
        %795 = vmatprep.subr.mxu0 0.0
        %796 = vmatpush1.xpose.msra.mxu0 0.0
        %797 = vmatprep.subr.mxu0 0.0
        %798 = vmatpush1.xpose.msra.mxu0 0.0
        %799 = vmatprep.subr.mxu0 0.0
        %800 = vmatpush1.xpose.msra.mxu0 0.0
        %801 = vmatprep.subr.mxu0 0.0
        %802 = vmatpush1.xpose.msra.mxu0 0.0
        %803 = vmatprep.subr.mxu0 0.0
        %804 = vmatpush1.xpose.msra.mxu0 0.0
        %805 = vmatprep.subr.mxu0 0.0
        %806 = vmatpush1.xpose.msra.mxu0 0.0
        %807 = vmatprep.subr.mxu0 0.0
        %808 = vmatpush1.xpose.msra.mxu0 0.0
        %809 = vmatprep.subr.mxu0 0.0
        %810 = vmatpush1.xpose.msra.mxu0 0.0
        %811 = vmatprep.subr.mxu0 0.0
        %812 = vmatpush1.xpose.msra.mxu0 0.0
        %813 = vmatprep.subr.mxu0 0.0
        %814 = vmatpush1.xpose.msra.mxu0 0.0
        %815 = vmatprep.subr.mxu0 0.0
        %816 = vmatpush1.xpose.msra.mxu0 0.0
        %817 = vmatprep.subr.mxu0 0.0
        %818 = vmatpush1.xpose.msra.mxu0 0.0
        %819 = vmatprep.subr.mxu0 0.0
        %820 = vmatpush1.xpose.msra.mxu0 0.0
        %821 = vmatprep.subr.mxu0 0.0
        %822 = vmatpush1.xpose.msra.mxu0 0.0
        %823 = vmatprep.subr.mxu0 0.0
        %824 = vmatpush1.xpose.msra.mxu0 0.0
        %825 = vmatprep.subr.mxu0 0.0
        %826 = vmatpush1.xpose.msra.mxu0 0.0
        %827 = vmatprep.subr.mxu0 0.0
        %828 = vmatpush1.xpose.msra.mxu0 0.0
        %829 = vmatprep.subr.mxu0 0.0
        %830 = vmatpush1.xpose.msra.mxu0 0.0
        %831 = vmatprep.subr.mxu0 0.0
        %832 = vmatpush1.xpose.msra.mxu0 0.0
        %833 = vmatprep.subr.mxu0 0.0
        %834 = vmatpush1.xpose.msra.mxu0 0.0
        %835 = vmatprep.subr.mxu0 0.0
        %836 = vmatpush1.xpose.msra.mxu0 0.0
        %837 = vmatprep.subr.mxu0 0.0
        %838 = vmatpush1.xpose.msra.mxu0 0.0
        %839 = vmatprep.subr.mxu0 0.0
        %840 = vmatpush1.xpose.msra.mxu0 0.0
        %841 = vmatprep.subr.mxu0 0.0
        %842 = vmatpush1.xpose.msra.mxu0 0.0
        %843 = vmatprep.mubr.f32.mxu0 0.0
        %844 = vmatmul.mubr.f32.gmra.mrb[0].mxu0 %v771
        %v845 = vpop.f32.mrb[0].mxu0
        %v846 = vadd.f32 0.0, %v845
        %v847 = vpop.f32.mrb[0].mxu0
        %848 = vdwg.mxu0
        %v850 = vsel %vm301, %v611, 0
        %v853 = vsel %vm301, %v295, 0
        %v856 = vsel %vm301, %v296, 0
        %858 = vmatprep.subr.mxu0 0.0
        %859 = vmatpush1.xpose.msra.mxu0 %v853
        %860 = vmatprep.subr.mxu0 0.0
        %861 = vmatpush1.xpose.msra.mxu0 %v856
        %862 = vmatprep.subr.mxu0 0.0
        %863 = vmatpush1.xpose.msra.mxu0 0.0
        %864 = vmatprep.subr.mxu0 0.0
        %865 = vmatpush1.xpose.msra.mxu0 0.0
        %866 = vmatprep.subr.mxu0 0.0
        %867 = vmatpush1.xpose.msra.mxu0 0.0
        %868 = vmatprep.subr.mxu0 0.0
        %869 = vmatpush1.xpose.msra.mxu0 0.0
        %870 = vmatprep.subr.mxu0 0.0
        %871 = vmatpush1.xpose.msra.mxu0 0.0
        %872 = vmatprep.subr.mxu0 0.0
        %873 = vmatpush1.xpose.msra.mxu0 0.0
        %874 = vmatprep.subr.mxu0 0.0
        %875 = vmatpush1.xpose.msra.mxu0 0.0
        %876 = vmatprep.subr.mxu0 0.0
        %877 = vmatpush1.xpose.msra.mxu0 0.0
        %878 = vmatprep.subr.mxu0 0.0
        %879 = vmatpush1.xpose.msra.mxu0 0.0
        %880 = vmatprep.subr.mxu0 0.0
        %881 = vmatpush1.xpose.msra.mxu0 0.0
        %882 = vmatprep.subr.mxu0 0.0
        %883 = vmatpush1.xpose.msra.mxu0 0.0
        %884 = vmatprep.subr.mxu0 0.0
        %885 = vmatpush1.xpose.msra.mxu0 0.0
        %886 = vmatprep.subr.mxu0 0.0
        %887 = vmatpush1.xpose.msra.mxu0 0.0
        %888 = vmatprep.subr.mxu0 0.0
        %889 = vmatpush1.xpose.msra.mxu0 0.0
        %890 = vmatprep.subr.mxu0 0.0
        %891 = vmatpush1.xpose.msra.mxu0 0.0
        %892 = vmatprep.subr.mxu0 0.0
        %893 = vmatpush1.xpose.msra.mxu0 0.0
        %894 = vmatprep.subr.mxu0 0.0
        %895 = vmatpush1.xpose.msra.mxu0 0.0
        %896 = vmatprep.subr.mxu0 0.0
        %897 = vmatpush1.xpose.msra.mxu0 0.0
        %898 = vmatprep.subr.mxu0 0.0
        %899 = vmatpush1.xpose.msra.mxu0 0.0
        %900 = vmatprep.subr.mxu0 0.0
        %901 = vmatpush1.xpose.msra.mxu0 0.0
        %902 = vmatprep.subr.mxu0 0.0
        %903 = vmatpush1.xpose.msra.mxu0 0.0
        %904 = vmatprep.subr.mxu0 0.0
        %905 = vmatpush1.xpose.msra.mxu0 0.0
        %906 = vmatprep.subr.mxu0 0.0
        %907 = vmatpush1.xpose.msra.mxu0 0.0
        %908 = vmatprep.subr.mxu0 0.0
        %909 = vmatpush1.xpose.msra.mxu0 0.0
        %910 = vmatprep.subr.mxu0 0.0
        %911 = vmatpush1.xpose.msra.mxu0 0.0
        %912 = vmatprep.subr.mxu0 0.0
        %913 = vmatpush1.xpose.msra.mxu0 0.0
        %914 = vmatprep.subr.mxu0 0.0
        %915 = vmatpush1.xpose.msra.mxu0 0.0
        %916 = vmatprep.subr.mxu0 0.0
        %917 = vmatpush1.xpose.msra.mxu0 0.0
        %918 = vmatprep.subr.mxu0 0.0
        %919 = vmatpush1.xpose.msra.mxu0 0.0
        %920 = vmatprep.subr.mxu0 0.0
        %921 = vmatpush1.xpose.msra.mxu0 0.0
        %922 = vmatprep.mubr.f32.mxu0 0.0
        %923 = vmatmul.mubr.f32.gmra.mrb[0].mxu0 %v850
        %v924 = vpop.f32.mrb[0].mxu0
        %v925 = vadd.f32 0.0, %v924
        %v926 = vpop.f32.mrb[0].mxu0
        %927 = vdwg.mxu0
        %v928 = vsel %vm301, %v688, 0.0
        %v929 = vsel %vm301, %v767, 0.0
        %v930 = vadd.f32 %v928, %v929
        %v931 = vsel %vm301, %v846, 0.0
        %v932 = vadd.f32 %v930, %v931
        %v933 = vsel %vm301, %v925, 0.0
        %v934 = vadd.f32 %v932, %v933
        %v935 = vlaneseq
        %v936 = vshrl.u32 %v935, 7
        %v937 = vsub.s32 0, %v936
        %v938 = vrot.slane %v934, %v937
        %940 = vbcast.lane.b32.xlu0 %v938, 256
        %v941 = vpop.permute.xlu0 %940
        %s943 = sor.u32 256, 8
        %944 = vbcast.lane.b32.xlu0 %v938, %s943
        %v945 = vpop.permute.xlu0 %944
        %v946 = vlaneseq
        %v947 = vshrl.u32 %v946, 7
        %v948 = vsub.s32 1, %v947
        %v949 = vrot.slane %v934, %v948
        %951 = vbcast.lane.b32.xlu0 %v949, 256
        %v952 = vpop.permute.xlu0 %951
        %s954 = sor.u32 256, 8
        %955 = vbcast.lane.b32.xlu0 %v949, %s954
        %v956 = vpop.permute.xlu0 %955
        %v957 = vlaneseq
        %v958 = vshrl.u32 %v957, 7
        %v959 = vsub.s32 2, %v958
        %v960 = vrot.slane %v934, %v959
        %962 = vbcast.lane.b32.xlu0 %v960, 256
        %v963 = vpop.permute.xlu0 %962
        %s965 = sor.u32 256, 8
        %966 = vbcast.lane.b32.xlu0 %v960, %s965
        %v967 = vpop.permute.xlu0 %966
        %v968 = vlaneseq
        %v969 = vshrl.u32 %v968, 7
        %v970 = vsub.s32 3, %v969
        %v971 = vrot.slane %v934, %v970
        %973 = vbcast.lane.b32.xlu0 %v971, 256
        %v974 = vpop.permute.xlu0 %973
        %s976 = sor.u32 256, 8
        %977 = vbcast.lane.b32.xlu0 %v971, %s976
        %v978 = vpop.permute.xlu0 %977
        %v979 = vlaneseq
        %v980 = vshrl.u32 %v979, 7
        %v981 = vsub.s32 4, %v980
        %v982 = vrot.slane %v934, %v981
        %984 = vbcast.lane.b32.xlu0 %v982, 256
        %v985 = vpop.permute.xlu0 %984
        %s987 = sor.u32 256, 8
        %988 = vbcast.lane.b32.xlu0 %v982, %s987
        %v989 = vpop.permute.xlu0 %988
        %v990 = vlaneseq
        %v991 = vshrl.u32 %v990, 7
        %v992 = vsub.s32 5, %v991
        %v993 = vrot.slane %v934, %v992
        %995 = vbcast.lane.b32.xlu0 %v993, 256
        %v996 = vpop.permute.xlu0 %995
        %s998 = sor.u32 256, 8
        %999 = vbcast.lane.b32.xlu0 %v993, %s998
        %v1000 = vpop.permute.xlu0 %999
        %v1001 = vlaneseq
        %v1002 = vshrl.u32 %v1001, 7
        %v1003 = vsub.s32 6, %v1002
        %v1004 = vrot.slane %v934, %v1003
        %1006 = vbcast.lane.b32.xlu0 %v1004, 256
        %v1007 = vpop.permute.xlu0 %1006
        %s1009 = sor.u32 256, 8
        %1010 = vbcast.lane.b32.xlu0 %v1004, %s1009
        %v1011 = vpop.permute.xlu0 %1010
        %v1012 = vlaneseq
        %v1013 = vshrl.u32 %v1012, 7
        %v1014 = vsub.s32 7, %v1013
        %v1015 = vrot.slane %v934, %v1014
        %1017 = vbcast.lane.b32.xlu0 %v1015, 256
        %v1018 = vpop.permute.xlu0 %1017
        %s1020 = sor.u32 256, 8
        %1021 = vbcast.lane.b32.xlu0 %v1015, %s1020
        %v1022 = vpop.permute.xlu0 %1021
        %v1024 = vcombine.high %v607, %v607
        %v1026 = vunpack.c.l.s4 1966171168
        %v1027 = vunpack.c.0.s8 %v1026
        %v1028 = vlaneseq
        %v1029 = vshrl.u32 %v1028, 7
        %v1030 = vsub.s32 %v1027, %v1029
        %v1031 = vrot.slane %v607, %v1030
        %v1033 = vunpack.c.l.s4 1966171168
        %v1034 = vunpack.c.0.s8 %v1033
        %v1035 = vlaneseq
        %v1036 = vshrl.u32 %v1035, 7
        %v1037 = vsub.s32 %v1034, %v1036
        %v1038 = vrot.slane %v1024, %v1037
        %v1039 = vcombine.high %v1031, %v1031
        %v1040 = vcombine.high %v1038, %v1038
        %v1042 = vunpack.c.l.s4 1966171168
        %v1043 = vunpack.c.0.s8 %v1042
        %v1044 = vlaneseq
        %v1045 = vshrl.u32 %v1044, 7
        %v1046 = vsub.s32 %v1043, %v1045
        %v1047 = vrot.slane %v1031, %v1046
        %v1049 = vunpack.c.l.s4 1966171168
        %v1050 = vunpack.c.0.s8 %v1049
        %v1051 = vlaneseq
        %v1052 = vshrl.u32 %v1051, 7
        %v1053 = vsub.s32 %v1050, %v1052
        %v1054 = vrot.slane %v1038, %v1053
        %v1056 = vunpack.c.l.s4 1966171168
        %v1057 = vunpack.c.0.s8 %v1056
        %v1058 = vlaneseq
        %v1059 = vshrl.u32 %v1058, 7
        %v1060 = vsub.s32 %v1057, %v1059
        %v1061 = vrot.slane %v1039, %v1060
        %v1063 = vunpack.c.l.s4 1966171168
        %v1064 = vunpack.c.0.s8 %v1063
        %v1065 = vlaneseq
        %v1066 = vshrl.u32 %v1065, 7
        %v1067 = vsub.s32 %v1064, %v1066
        %v1068 = vrot.slane %v1040, %v1067
        %v1069 = vcombine.high %v1047, %v1047
        %v1070 = vcombine.high %v1054, %v1054
        %v1071 = vcombine.high %v1061, %v1061
        %v1072 = vcombine.high %v1068, %v1068
        %v1073 = vlaneseq
        %v1074 = vshrl.u32 %v1073, 7
        %v1075 = vsub.s32 0, %v1074
        %v1076 = vrot.slane %v1047, %v1075
        %v1077 = vlaneseq
        %v1078 = vshrl.u32 %v1077, 7
        %v1079 = vsub.s32 0, %v1078
        %v1080 = vrot.slane %v1061, %v1079
        %v1081 = vlaneseq
        %v1082 = vshrl.u32 %v1081, 7
        %v1083 = vsub.s32 0, %v1082
        %v1084 = vrot.slane %v1069, %v1083
        %v1085 = vlaneseq
        %v1086 = vshrl.u32 %v1085, 7
        %v1087 = vsub.s32 0, %v1086
        %v1088 = vrot.slane %v1071, %v1087
        %v1089 = vlaneseq
        %v1090 = vshrl.u32 %v1089, 7
        %v1091 = vsub.s32 0, %v1090
        %v1092 = vrot.slane %v1054, %v1091
        %v1093 = vlaneseq
        %v1094 = vshrl.u32 %v1093, 7
        %v1095 = vsub.s32 0, %v1094
        %v1096 = vrot.slane %v1068, %v1095
        %v1097 = vlaneseq
        %v1098 = vshrl.u32 %v1097, 7
        %v1099 = vsub.s32 0, %v1098
        %v1100 = vrot.slane %v1070, %v1099
        %v1101 = vlaneseq
        %v1102 = vshrl.u32 %v1101, 7
        %v1103 = vsub.s32 0, %v1102
        %v1104 = vrot.slane %v1072, %v1103
        %v1113 = vadd.f32 %v941, %v1076
        %v1114 = vadd.f32 %v945, %v1076
        %v1115 = vadd.f32 %v952, %v1080
        %v1116 = vadd.f32 %v956, %v1080
        %v1117 = vadd.f32 %v963, %v1084
        %v1118 = vadd.f32 %v967, %v1084
        %v1119 = vadd.f32 %v974, %v1088
        %v1120 = vadd.f32 %v978, %v1088
        %v1121 = vadd.f32 %v985, %v1092
        %v1122 = vadd.f32 %v989, %v1092
        %v1123 = vadd.f32 %v996, %v1096
        %v1124 = vadd.f32 %v1000, %v1096
        %v1125 = vadd.f32 %v1007, %v1100
        %v1126 = vadd.f32 %v1011, %v1100
        %v1127 = vadd.f32 %v1018, %v1104
        %v1128 = vadd.f32 %v1022, %v1104
        %1129 = vst.msk [vmem:[%s283] sm:$0xff] %vm301, %v1113
        %1130 = vst.msk [vmem:[%s283 + $0x8] sm:$0xff] %vm301, %v1114
        %1131 = vst.msk [vmem:[%s283 + $0x10] sm:$0xff] %vm301, %v1115
        %1132 = vst.msk [vmem:[%s283 + $0x18] sm:$0xff] %vm301, %v1116
        %1133 = vst.msk [vmem:[%s283 + $0x20] sm:$0xff] %vm301, %v1117
        %1134 = vst.msk [vmem:[%s283 + $0x28] sm:$0xff] %vm301, %v1118
        %1135 = vst.msk [vmem:[%s283 + $0x30] sm:$0xff] %vm301, %v1119
        %1136 = vst.msk [vmem:[%s283 + $0x38] sm:$0xff] %vm301, %v1120
        %1137 = vst.msk [vmem:[%s283 + $0x40] sm:$0xff] %vm301, %v1121
        %1138 = vst.msk [vmem:[%s283 + $0x48] sm:$0xff] %vm301, %v1122
        %1139 = vst.msk [vmem:[%s283 + $0x50] sm:$0xff] %vm301, %v1123
        %1140 = vst.msk [vmem:[%s283 + $0x58] sm:$0xff] %vm301, %v1124
        %1141 = vst.msk [vmem:[%s283 + $0x60] sm:$0xff] %vm301, %v1125
        %1142 = vst.msk [vmem:[%s283 + $0x68] sm:$0xff] %vm301, %v1126
        %1143 = vst.msk [vmem:[%s283 + $0x70] sm:$0xff] %vm301, %v1127
        %1144 = vst.msk [vmem:[%s283 + $0x78] sm:$0xff] %vm301, %v1128
        %s1145 = sand.u32 %s146, 1
        %s1146 = scalar_lea.sflag [#allocation4], %s1145
        %s1147 = sand.u32 %s146, 1
        %s1148 = smul.addr %s1147, 128
        %s1149 = scalar_lea.vmem [#allocation8], %s1148
        // Predicated region
        $region49: #{tpu_custom_call.1} parent=35 // pred_check
          %p1150 = pneg %p156
        $region50: #{tpu_custom_call.1} parent=35 // pred_check_branch
          %1152 = sbr.rel (%p1150) target = $region52
        $region51: #{tpu_custom_call.1} parent=35 // pred_region
          %s1153 = smul.u32 8, %s25
          %s1155 = ssub.s32 2048, 2048
          %1156 = vsyncadd %s1146, %s1155
          %s1157 = smul.addr %s1153, 2
          %s1158 = smul.addr %s24, 16
          %s1159 = sadd.s32 %s1157, %s1158
          %s1160 = smul.addr %s1159, 128
          %s1161 = scalar_lea.hbm %s4, %s1160
          %s1162 = sshll.u32 %s1149, 4
          %s1163 = int_to_ptr.vmem [resolvable:$true] %s1162
          %1168 = dma.vmem_to_hbm [thread:$0]  %s1163, 2048, %s1161, %s1146, 128, 128, 8
        $region52: #{tpu_custom_call.1} parent=35 // pred_fallthru
          _
      $region36: #{tpu_custom_call.1} parent=5 // pred_fallthru
        _
      %p1169 = scmp.le.s32.totalorder 2, %s15
      // Predicated region
      $region53: #{tpu_custom_call.1} parent=5 // pred_check
        %p1170 = pneg %p1169
      $region54: #{tpu_custom_call.1} parent=5 // pred_check_branch
        %1172 = sbr.rel (%p1170) target = $region56
      $region55: #{tpu_custom_call.1} parent=5 // pred_region
        %s1173 = ssub.s32 %s15, 2
        // Predicated region
        $region57: #{tpu_custom_call.1} parent=55 // pred_check
          %p1174 = pneg %p162
        $region58: #{tpu_custom_call.1} parent=55 // pred_check_branch
          %1176 = sbr.rel (%p1174) target = $region60
        $region59: #{tpu_custom_call.1} parent=55 // pred_region
          %s1177 = sand.u32 %s147, 1
          %s1178 = scalar_lea.sflag [#allocation4], %s1177
          %s1179 = sand.u32 %s147, 1
          %s1180 = smul.addr %s1179, 128
          %s1181 = scalar_lea.vmem [#allocation8], %s1180
          %1182 = dma.done %s1178, 2048
        $region60: #{tpu_custom_call.1} parent=55 // pred_fallthru
          _
      $region56: #{tpu_custom_call.1} parent=5 // pred_fallthru
        _
    $region6: #{tpu_custom_call.1} parent=1 // loop_footer
      %s19 = sadd.s32 1, %s15
    $region7: #{tpu_custom_call.1} parent=1 // loop_footer_branch
      %14 = sbr.rel target = $region3
    $region8: #{tpu_custom_call.1} parent=1 // loop_exit
      _
    %1183 = vsyncpa [#allocation3], 1
    %s1184 = scalar_lea.sflag [#allocation3], 1
    %1185 = vsyncpa %s1184, 1
    %1186 = vsyncpa [#allocation6], 1
    %1187 = vsyncpa [#allocation4], 1
    %s1188 = scalar_lea.sflag [#allocation4], 1
    %1189 = vsyncpa %s1188, 1

</llo_original>
